<compile_context>
chip_gen: v7x
topology: tpu7x:2x2x1
jax: 0.10.0
libtpu: 0.0.40
codegen_flags: <defaults>
</compile_context>

<pallas_src>
import math

import jax
import jax.numpy as jnp
from jax.experimental import pallas as pl
from jax.experimental.pallas import tpu as pltpu


def _fourier_kernel(x_ref, bcat_ref, phase_ref, out_ref):
    # (tile_b, input_dim) @ (input_dim, 2F) on the MXU, f32 accumulation.
    # bcat_ref already holds 2*pi*[B | B] (folded once on the host).
    x_proj = jnp.dot(x_ref[...], bcat_ref[...], preferred_element_type=jnp.float32)
    # cos(t) = sin(t + pi/2): one full-width (tile_b, 2F) sin + one lane-dense
    # unmasked store.  No concatenate, no separate cos polynomial.
    out_ref[...] = jnp.sin(x_proj + phase_ref[...]).astype(out_ref.dtype)


def _round_up(v, m):
    return ((v + m - 1) // m) * m


def fourier_features(x, B, *, tile_b=4096, out_dtype=jnp.float32):
    """x: (batch, input_dim) f32; B: (input_dim, F) f32 -> (batch, 2F) out_dtype.

    tile_b: batch rows per grid step (multiple of 8).  Default 4096; VMEM cost
    per buffer at 4096 rows is ~2 MiB for the x tile (the 32-wide minor dim is
    lane-padded to 128) + ~2 MiB for the (4096, 2F) f32 output tile, so
    ~8-9 MiB double-buffered — comfortably inside every generation's default
    scoped VMEM limit.  The tile is additionally capped so the grid has at
    least 2 steps when batch allows (keeps both v7x TensorCores busy).
    """
    batch, input_dim = x.shape
    input_dim_b, num_ff = B.shape
    assert input_dim == input_dim_b, "x / B inner dims must match"
    two_f = 2 * num_ff

    # Host-side one-time constants (B is a fixed non-trainable projection):
    #   B_cat = 2*pi * [B | B]  -> (input_dim, 2F)
    #   phase = [0]*F ++ [pi/2]*F -> (1, 2F), so sin(x@B_cat + phase) gives
    #   [sin(2*pi*x@B) | cos(2*pi*x@B)].
    B_scaled = ((2.0 * math.pi) * B).astype(jnp.float32)
    B_cat = jnp.concatenate([B_scaled, B_scaled], axis=1)
    phase = jnp.concatenate(
        [jnp.zeros((1, num_ff), jnp.float32),
         jnp.full((1, num_ff), 0.5 * math.pi, jnp.float32)],
        axis=1,
    )

    # Effective batch tile: multiple of 8 (sublane), never larger than the
    # 8-rounded-up batch, and small enough that the grid has >= 2 steps when
    # the batch permits (so the "parallel" axis shards across v7x's 2 cores).
    batch_padded = _round_up(batch, 8)
    eff_tile = max(8, min(int(tile_b), batch_padded))
    eff_tile = _round_up(eff_tile, 8)
    if batch_padded >= 16:
        half = _round_up(pl.cdiv(batch_padded, 2), 8)
        eff_tile = min(eff_tile, half)

    grid = (pl.cdiv(batch, eff_tile),)  # ragged last tile handled by Pallas

    out_itemsize = jnp.dtype(out_dtype).itemsize
    cost = pl.CostEstimate(
        flops=2 * batch * input_dim * two_f,
        transcendentals=batch * two_f,
        bytes_accessed=(
            4 * (batch * input_dim + input_dim * two_f + two_f)
            + out_itemsize * batch * two_f
        ),
    )

    return pl.pallas_call(
        _fourier_kernel,
        out_shape=jax.ShapeDtypeStruct((batch, two_f), out_dtype),
        grid_spec=pltpu.PrefetchScalarGridSpec(
            num_scalar_prefetch=0,
            grid=grid,
            in_specs=[
                # x tiled over batch; full feature dim per tile.
                pl.BlockSpec((eff_tile, input_dim), lambda i: (i, 0)),
                # B_cat is tiny (input_dim x 2F): resident in full every step.
                pl.BlockSpec((input_dim, two_f), lambda i: (0, 0)),
                # phase row: (1, 2F) == full array shape, resident.
                pl.BlockSpec((1, two_f), lambda i: (0, 0)),
            ],
            out_specs=pl.BlockSpec((eff_tile, two_f), lambda i: (i, 0)),
        ),
        compiler_params=pltpu.CompilerParams(
            # Batch axis is independent -> shards across v7x's 2 TensorCores.
            dimension_semantics=("parallel",),
        ),
        cost_estimate=cost,
    )(x, B_cat, phase)


def _reference(x, B):
    x_proj = 2.0 * math.pi * (x @ B)
    return jnp.concatenate([jnp.sin(x_proj), jnp.cos(x_proj)], axis=-1)


if __name__ == "__main__":
    # Shapes consistent with the module's forward:
    #   input_dim = 32, num_fourier_features = 64  ->  output last dim = 128.
    input_dim, num_ff = 32, 64
    sigma = 1.0

    key = jax.random.PRNGKey(0)
    kx, kb, kx2 = jax.random.split(key, 3)

    # Deterministic init of the (non-trainable) random projection matrix B,
    # mirroring torch.randn(input_dim, num_fourier_features) * sigma.
    B = jax.random.normal(kb, (input_dim, num_ff), dtype=jnp.float32) * sigma

    # --- Small smoke test (batch=16 -> 2 grid steps of 8 rows) ------------
    batch = 16
    x = jax.random.normal(kx, (batch, input_dim), dtype=jnp.float32)
    out = jax.block_until_ready(fourier_features(x, B))
    ref = _reference(x, B)
    assert out.shape == (batch, 2 * num_ff)
    assert jnp.allclose(out, ref, atol=1e-4, rtol=1e-4), "mismatch vs reference"

    # --- Ragged-batch test (exercises pl.cdiv grid + partial last tile) ---
    batch2 = 200  # not a multiple of the tile -> partial last block
    x2 = jax.random.normal(kx2, (batch2, input_dim), dtype=jnp.float32)
    out2 = jax.block_until_ready(fourier_features(x2, B, tile_b=128))
    ref2 = _reference(x2, B)
    assert out2.shape == (batch2, 2 * num_ff)
    assert jnp.allclose(out2, ref2, atol=1e-4, rtol=1e-4), "ragged mismatch"

    print("KERNEL_OK")
</pallas_src>

<mosaic_0001>
module attributes {stable_mosaic.version = 11 : i64} {
  func.func @_fourier_kernel(%arg0: i32, %arg1: memref<8x32xf32, #tpu.memory_space<vmem>>, %arg2: memref<32x128xf32, #tpu.memory_space<vmem>>, %arg3: memref<1x128xf32, #tpu.memory_space<vmem>>, %arg4: memref<8x128xf32, #tpu.memory_space<vmem>>) attributes {dimension_semantics = [#tpu.dimension_semantics<parallel>], iteration_bounds = array<i64: 2>, scalar_prefetch = 0 : i64, scratch_operands = 0 : i64, tpu.core_type = #tpu.core_type<tc>, window_params = [{transform_indices = @transform_0, window_bounds = array<i64: 8, 32>}, {pipeline_mode = #tpu.pipeline_mode<synchronous>, transform_indices = @transform_1, window_bounds = array<i64: 32, 128>}, {pipeline_mode = #tpu.pipeline_mode<synchronous>, transform_indices = @transform_2, window_bounds = array<i64: 1, 128>}, {transform_indices = @transform_3, window_bounds = array<i64: 8, 128>}]} {
    %c0 = arith.constant 0 : index
    %c0_0 = arith.constant 0 : index
    %0 = vector.load %arg1[%c0, %c0_0] : memref<8x32xf32, #tpu.memory_space<vmem>>, vector<8x32xf32>
    %c0_1 = arith.constant 0 : index
    %c0_2 = arith.constant 0 : index
    %1 = vector.load %arg2[%c0_1, %c0_2] : memref<32x128xf32, #tpu.memory_space<vmem>>, vector<32x128xf32>
    %cst = arith.constant dense<0.000000e+00> : vector<8x128xf32>
    %2 = tpu.matmul %0, %1, %cst {dimension_numbers = #tpu.dot_dimension_numbers<[1], [0], [0], [1], [0, 0, 1, 1], [], []>} : vector<8x32xf32>, vector<32x128xf32>, vector<8x128xf32> -> vector<8x128xf32>
    %c0_3 = arith.constant 0 : index
    %c0_4 = arith.constant 0 : index
    %3 = vector.load %arg3[%c0_3, %c0_4] : memref<1x128xf32, #tpu.memory_space<vmem>>, vector<1x128xf32>
    %4 = vector.broadcast %3 : vector<1x128xf32> to vector<8x128xf32>
    %5 = arith.addf %2, %4 : vector<8x128xf32>
    %6 = math.sin %5 : vector<8x128xf32>
    %c0_5 = arith.constant 0 : index
    %c0_6 = arith.constant 0 : index
    %7 = vector.load %arg4[%c0_5, %c0_6] : memref<8x128xf32, #tpu.memory_space<vmem>>, vector<8x128xf32>
    tpu.vector_store %arg4[%c0_5, %c0_6], %6 {strides = array<i32>} : memref<8x128xf32, #tpu.memory_space<vmem>>, vector<8x128xf32>,
    return
  }
  func.func @transform_0(%arg0: i32) -> (i32, i32) {
    %c0_i32 = arith.constant 0 : i32
    %c0_i32_0 = arith.constant 0 : i32
    return %arg0, %c0_i32 : i32, i32
  }
  func.func @transform_1(%arg0: i32) -> (i32, i32) {
    %c0_i32 = arith.constant 0 : i32
    %c0_i32_0 = arith.constant 0 : i32
    %c0_i32_1 = arith.constant 0 : i32
    return %c0_i32, %c0_i32_0 : i32, i32
  }
  func.func @transform_2(%arg0: i32) -> (i32, i32) {
    %c0_i32 = arith.constant 0 : i32
    %c0_i32_0 = arith.constant 0 : i32
    %c0_i32_1 = arith.constant 0 : i32
    return %c0_i32, %c0_i32_0 : i32, i32
  }
  func.func @transform_3(%arg0: i32) -> (i32, i32) {
    %c0_i32 = arith.constant 0 : i32
    %c0_i32_0 = arith.constant 0 : i32
    return %arg0, %c0_i32 : i32, i32
  }
}

</mosaic_0001>

<llo_original>
// kernel: tpu_custom_call.1
$region0: #{tpu_custom_call.1}
  #allocation0 [shape = 'u32[]', space=smem, size = 0x4, offset = 0x4, fixed_abs, tag = 'smem constant byte address 0x4 - core index']
  #allocation1 [shape = 'u32[144,128]{1,0:T(1,128)}', space=vmem, size = 0x12000, scoped, tag = 'internal scratch']
  %s0 = inlined_call_operand.hbm [shape: f32[16,32], index: 0, kind: input, shape index: {}]
  %s1 = inlined_call_operand.hbm [shape: f32[32,128], index: 1, kind: input, shape index: {}]
  %s2 = inlined_call_operand.vmem [shape: f32[1,128], index: 2, kind: input, shape index: {}]
  %s3 = inlined_call_operand.hbm [shape: f32[16,128], index: 3, kind: output, shape index: {}]
  %s4 = sld [smem:[#allocation0]]
  $region53: #{tpu_custom_call.1} parent=0
    _
  %s6 = ssub.s32 1, %s4
  %s7 = scalar_select 0, %s6, %s4
  $region1: #{tpu_custom_call.1} parent=0
    #allocation2 [shape = 'u8[8192]{0}', space=vmem, size = 0x2000, scoped, tag = 'input window, operand 0']
    #allocation3 [shape = 's32[2]{0}', space=sflag, size = 0x8, scoped, tag = 'scoped memory for tpu_custom_call.1']
    #allocation4 [shape = 's32[2]{0}', space=sflag, size = 0x8, scoped, tag = 'scoped memory for tpu_custom_call.1']
    #allocation5 [shape = 'u8[16384]{0}', space=vmem, size = 0x4000, scoped, tag = 'input window, operand 1, single buffered']
    #allocation6 [shape = 's32[1]{0}', space=sflag, size = 0x4, scoped, tag = 'scoped memory for tpu_custom_call.1']
    #allocation7 [shape = 'u8[8192]{0}', space=vmem, size = 0x2000, scoped, tag = 'output window, operand 0']
    %8 = vsyncpa [#allocation3], 0
    %s9 = scalar_lea.sflag [#allocation3], 1
    %10 = vsyncpa %s9, 0
    %11 = vsyncpa [#allocation6], 0
    %12 = vsyncpa [#allocation4], 0
    %s13 = scalar_lea.sflag [#allocation4], 1
    %14 = vsyncpa %s13, 0
    loop: start=0, step=1, limit=4
    $region2: #{tpu_custom_call.1} parent=1 // loop_pre_header
      _
    $region3: #{tpu_custom_call.1} parent=1 // loop_header
      %s16 = sphi 0, %s20
      %p17 = scmp.ge.s32.totalorder %s16, 4
      %s26 = sphi 0, %s28
      %s29 = sphi 0, %s26
      %s30 = sphi 0, %s29
      %s46 = sphi 0, %s30
      %s50 = sphi 0, %s50
      %s52 = sphi 0, %s50
      %s53 = sphi 0, %s52
      %s67 = sphi 0, %s53
      %s71 = sphi 0, %s71
      %s73 = sphi 0, %s71
      %s74 = sphi 0, %s73
      %s88 = sphi 0, %s74
      %s94 = sphi 0, %s96
      %s97 = sphi 0, %s94
      %s98 = sphi 0, %s97
      %s114 = sphi 0, %s98
    $region4: #{tpu_custom_call.1} parent=1 // loop_header_branch
      %19 = sbr.rel (%p17) target = $region8
    $region5: #{tpu_custom_call.1} parent=1 // loop_body
      %s21 = ssub.s32 %s16, 1
      %s22 = ssub.s32 %s16, 2
      %s23 = sadd.s32 %s16, 1
      %s24 = ssub.s32 %s16, %s23
      %p25 = scmp.eq.s32.totalorder %s24, 0
      %s27 = sadd.s32 %s26, 1
      %s28 = scalar_select %p25, %s26, %s27
      %p31 = pneg %p25
      %p32 = scmp.eq.s32.totalorder %s16, 1
      %p33 = por %p31, %p32
      %p34 = scmp.ne.s32.totalorder %s26, %s29
      %p35 = scmp.eq.s32.totalorder %s16, 0
      %p36 = por %p34, %p35
      %p37 = scmp.ne.s32.totalorder %s26, %s29
      %p38 = scmp.eq.s32.totalorder %s21, 1
      %p39 = por %p37, %p38
      %p40 = scmp.ne.s32.totalorder %s29, %s30
      %p41 = scmp.eq.s32.totalorder %s21, 0
      %p42 = por %p40, %p41
      %p43 = scmp.ne.s32.totalorder %s29, %s30
      %p44 = scmp.eq.s32.totalorder %s22, 1
      %p45 = por %p43, %p44
      %p47 = scmp.ne.s32.totalorder %s30, %s46
      %p48 = scmp.eq.s32.totalorder %s22, 0
      %p49 = por %p47, %p48
      %s51 = sadd.s32 %s50, 1
      %p54 = scmp.eq.s32.totalorder %s16, 1
      %p55 = scmp.ne.s32.totalorder %s50, %s52
      %p56 = scmp.eq.s32.totalorder %s16, 0
      %p57 = por %p55, %p56
      %p58 = scmp.ne.s32.totalorder %s50, %s52
      %p59 = scmp.eq.s32.totalorder %s21, 1
      %p60 = por %p58, %p59
      %p61 = scmp.ne.s32.totalorder %s52, %s53
      %p62 = scmp.eq.s32.totalorder %s21, 0
      %p63 = por %p61, %p62
      %p64 = scmp.ne.s32.totalorder %s52, %s53
      %p65 = scmp.eq.s32.totalorder %s22, 1
      %p66 = por %p64, %p65
      %p68 = scmp.ne.s32.totalorder %s53, %s67
      %p69 = scmp.eq.s32.totalorder %s22, 0
      %p70 = por %p68, %p69
      %s72 = sadd.s32 %s71, 1
      %p75 = scmp.eq.s32.totalorder %s16, 1
      %p76 = scmp.ne.s32.totalorder %s71, %s73
      %p77 = scmp.eq.s32.totalorder %s16, 0
      %p78 = por %p76, %p77
      %p79 = scmp.ne.s32.totalorder %s71, %s73
      %p80 = scmp.eq.s32.totalorder %s21, 1
      %p81 = por %p79, %p80
      %p82 = scmp.ne.s32.totalorder %s73, %s74
      %p83 = scmp.eq.s32.totalorder %s21, 0
      %p84 = por %p82, %p83
      %p85 = scmp.ne.s32.totalorder %s73, %s74
      %p86 = scmp.eq.s32.totalorder %s22, 1
      %p87 = por %p85, %p86
      %p89 = scmp.ne.s32.totalorder %s74, %s88
      %p90 = scmp.eq.s32.totalorder %s22, 0
      %p91 = por %p89, %p90
      %s92 = ssub.s32 %s16, %s23
      %p93 = scmp.eq.s32.totalorder %s92, 0
      %s95 = sadd.s32 %s94, 1
      %s96 = scalar_select %p93, %s94, %s95
      %p99 = pneg %p93
      %p100 = scmp.eq.s32.totalorder %s16, 1
      %p101 = por %p99, %p100
      %p102 = scmp.ne.s32.totalorder %s94, %s97
      %p103 = scmp.eq.s32.totalorder %s16, 0
      %p104 = por %p102, %p103
      %p105 = scmp.ne.s32.totalorder %s94, %s97
      %p106 = scmp.eq.s32.totalorder %s21, 1
      %p107 = por %p105, %p106
      %p108 = scmp.ne.s32.totalorder %s97, %s98
      %p109 = scmp.eq.s32.totalorder %s21, 0
      %p110 = por %p108, %p109
      %p111 = scmp.ne.s32.totalorder %s97, %s98
      %p112 = scmp.eq.s32.totalorder %s22, 1
      %p113 = por %p111, %p112
      %p115 = scmp.ne.s32.totalorder %s98, %s114
      %p116 = scmp.eq.s32.totalorder %s22, 0
      %p117 = por %p115, %p116
      %p118 = scmp.le.s32.totalorder 1, %s16
      %p119 = scmp.lt.s32.totalorder %s16, 3
      %p120 = pnand %p118, %p119
      %p121 = pneg %p120
      // Predicated region
      $region9: #{tpu_custom_call.1} parent=5 // pred_check
        _
      $region10: #{tpu_custom_call.1} parent=5 // pred_check_branch
        %123 = sbr.rel (%p120) target = $region12
      $region11: #{tpu_custom_call.1} parent=5 // pred_region
        %s124 = ssub.s32 %s16, 1
        // Predicated region
        $region13: #{tpu_custom_call.1} parent=11 // pred_check
          %p125 = pneg %p63
        $region14: #{tpu_custom_call.1} parent=11 // pred_check_branch
          %127 = sbr.rel (%p125) target = $region16
        $region15: #{tpu_custom_call.1} parent=11 // pred_region
          %s129 = ssub.s32 512, 512
          %130 = vsyncadd [#allocation6], %s129
          %s131 = sshll.u32 [#allocation5], 4
          %s132 = int_to_ptr.vmem [resolvable:$true] %s131
          %137 = dma.hbm_to_vmem [thread:$0]  %s1, 512, %s132, [#allocation6], 128, 128, 8
        $region16: #{tpu_custom_call.1} parent=11 // pred_fallthru
          _
        // Predicated region
        $region17: #{tpu_custom_call.1} parent=11 // pred_check
          %p138 = pneg %p84
        $region18: #{tpu_custom_call.1} parent=11 // pred_check_branch
          %140 = sbr.rel (%p138) target = $region20
        $region19: #{tpu_custom_call.1} parent=11 // pred_region
          _
        $region20: #{tpu_custom_call.1} parent=11 // pred_fallthru
          _
      $region12: #{tpu_custom_call.1} parent=5 // pred_fallthru
        _
      %p141 = scmp.lt.s32.totalorder %s16, 2
      // Predicated region
      $region21: #{tpu_custom_call.1} parent=5 // pred_check
        %p142 = pneg %p141
      $region22: #{tpu_custom_call.1} parent=5 // pred_check_branch
        %144 = sbr.rel (%p142) target = $region24
      $region23: #{tpu_custom_call.1} parent=5 // pred_region
        // Predicated region
        $region25: #{tpu_custom_call.1} parent=23 // pred_check
          %p145 = pneg %p36
        $region26: #{tpu_custom_call.1} parent=23 // pred_check_branch
          %147 = sbr.rel (%p145) target = $region28
        $region27: #{tpu_custom_call.1} parent=23 // pred_region
          %s148 = sand.u32 %s26, 1
          %s149 = scalar_lea.sflag [#allocation3], %s148
          %s150 = sand.u32 %s26, 1
          %s151 = smul.addr %s150, 8
          %s152 = scalar_lea.vmem [#allocation2], %s151
          %s154 = ssub.s32 128, 128
          %155 = vsyncadd %s149, %s154
          %s156 = smul.addr %s16, 128
          %s157 = scalar_lea.hbm %s0, %s156
          %s159 = sshll.u32 %s152, 4
          %s160 = int_to_ptr.vmem [resolvable:$true] %s159
          %162 = dma.hbm_to_vmem [thread:$0]  %s157, 128, %s160, %s149
        $region28: #{tpu_custom_call.1} parent=23 // pred_fallthru
          _
      $region24: #{tpu_custom_call.1} parent=5 // pred_fallthru
        _
      %p163 = scmp.le.s32.totalorder 1, %s16
      %p164 = scmp.lt.s32.totalorder %s16, 3
      %p165 = pnand %p163, %p164
      %p166 = pneg %p165
      // Predicated region
      $region29: #{tpu_custom_call.1} parent=5 // pred_check
        _
      $region30: #{tpu_custom_call.1} parent=5 // pred_check_branch
        %168 = sbr.rel (%p165) target = $region32
      $region31: #{tpu_custom_call.1} parent=5 // pred_region
        %s169 = ssub.s32 %s16, 1
        %s170 = sand.u32 %s29, 1
        %s171 = scalar_lea.sflag [#allocation3], %s170
        %s172 = sand.u32 %s29, 1
        %s173 = smul.addr %s172, 8
        %s174 = scalar_lea.vmem [#allocation2], %s173
        // Predicated region
        $region33: #{tpu_custom_call.1} parent=31 // pred_check
          %p175 = pneg %p42
        $region34: #{tpu_custom_call.1} parent=31 // pred_check_branch
          %177 = sbr.rel (%p175) target = $region36
        $region35: #{tpu_custom_call.1} parent=31 // pred_region
          %178 = dma.done %s171, 128
        $region36: #{tpu_custom_call.1} parent=31 // pred_fallthru
          _
        // Predicated region
        $region37: #{tpu_custom_call.1} parent=31 // pred_check
          %p179 = pneg %p63
        $region38: #{tpu_custom_call.1} parent=31 // pred_check_branch
          %181 = sbr.rel (%p179) target = $region40
        $region39: #{tpu_custom_call.1} parent=31 // pred_region
          %182 = dma.done [#allocation6], 512
        $region40: #{tpu_custom_call.1} parent=31 // pred_fallthru
          _
        %s183 = sand.u32 %s29, 1
        %s184 = scalar_lea.sflag [#allocation3], %s183
        %s185 = sand.u32 %s29, 1
        %s186 = smul.addr %s185, 8
        %s187 = scalar_lea.vmem [#allocation2], %s186
        %p188 = pneg %p42
        %p189 = pneg %p39
        %p190 = pneg %p63
        %p191 = pneg %p60
        %p192 = pneg %p84
        %p193 = pneg %p81
        %p194 = pneg %p110
        %p195 = pneg %p107
        %s196 = sand.u32 %s97, 1
        %s197 = scalar_lea.sflag [#allocation4], %s196
        %s198 = sand.u32 %s97, 1
        %s199 = smul.addr %s198, 8
        %s200 = scalar_lea.vmem [#allocation7], %s199
        %v201 = vld [vmem:[%s174] sm:$0xff]
        %v202 = vld [vmem:[#allocation5] sm:$0xff]
        %v203 = vld [vmem:[#allocation5 + $0x8] sm:$0xff]
        %v204 = vld [vmem:[#allocation5 + $0x10] sm:$0xff]
        %v205 = vld [vmem:[#allocation5 + $0x18] sm:$0xff]
        %v206 = vld [vmem:[%s2] sm:$0x1]
        %v208 = vlaneseq
        %v209 = vshrl.u32 %v208, 7
        %v210 = vsub.s32 0, %v209
        %v211 = vrot.slane %v206, %v210
        %vm213 = vcmask 261120
        %v215 = vsel %vm213, %v201, 0
        %217 = vmatprep.subr.mxu0 0.0
        %218 = vmatpush1.msra.mxu0 %v202
        %219 = vmatprep.subr.mxu0 0.0
        %220 = vmatpush1.msra.mxu0 %v203
        %221 = vmatprep.subr.mxu0 0.0
        %222 = vmatpush1.msra.mxu0 %v204
        %223 = vmatprep.subr.mxu0 0.0
        %224 = vmatpush1.msra.mxu0 %v205
        %225 = vmatprep.subr.mxu0 0.0
        %226 = vmatpush1.msra.mxu0 0.0
        %227 = vmatprep.subr.mxu0 0.0
        %228 = vmatpush1.msra.mxu0 0.0
        %229 = vmatprep.subr.mxu0 0.0
        %230 = vmatpush1.msra.mxu0 0.0
        %231 = vmatprep.subr.mxu0 0.0
        %232 = vmatpush1.msra.mxu0 0.0
        %233 = vmatprep.subr.mxu0 0.0
        %234 = vmatpush1.msra.mxu0 0.0
        %235 = vmatprep.subr.mxu0 0.0
        %236 = vmatpush1.msra.mxu0 0.0
        %237 = vmatprep.subr.mxu0 0.0
        %238 = vmatpush1.msra.mxu0 0.0
        %239 = vmatprep.subr.mxu0 0.0
        %240 = vmatpush1.msra.mxu0 0.0
        %241 = vmatprep.subr.mxu0 0.0
        %242 = vmatpush1.msra.mxu0 0.0
        %243 = vmatprep.subr.mxu0 0.0
        %244 = vmatpush1.msra.mxu0 0.0
        %245 = vmatprep.subr.mxu0 0.0
        %246 = vmatpush1.msra.mxu0 0.0
        %247 = vmatprep.subr.mxu0 0.0
        %248 = vmatpush1.msra.mxu0 0.0
        %249 = vmatprep.subr.mxu0 0.0
        %250 = vmatpush1.msra.mxu0 0.0
        %251 = vmatprep.subr.mxu0 0.0
        %252 = vmatpush1.msra.mxu0 0.0
        %253 = vmatprep.subr.mxu0 0.0
        %254 = vmatpush1.msra.mxu0 0.0
        %255 = vmatprep.subr.mxu0 0.0
        %256 = vmatpush1.msra.mxu0 0.0
        %257 = vmatprep.subr.mxu0 0.0
        %258 = vmatpush1.msra.mxu0 0.0
        %259 = vmatprep.subr.mxu0 0.0
        %260 = vmatpush1.msra.mxu0 0.0
        %261 = vmatprep.subr.mxu0 0.0
        %262 = vmatpush1.msra.mxu0 0.0
        %263 = vmatprep.subr.mxu0 0.0
        %264 = vmatpush1.msra.mxu0 0.0
        %265 = vmatprep.subr.mxu0 0.0
        %266 = vmatpush1.msra.mxu0 0.0
        %267 = vmatprep.subr.mxu0 0.0
        %268 = vmatpush1.msra.mxu0 0.0
        %269 = vmatprep.subr.mxu0 0.0
        %270 = vmatpush1.msra.mxu0 0.0
        %271 = vmatprep.subr.mxu0 0.0
        %272 = vmatpush1.msra.mxu0 0.0
        %273 = vmatprep.subr.mxu0 0.0
        %274 = vmatpush1.msra.mxu0 0.0
        %275 = vmatprep.subr.mxu0 0.0
        %276 = vmatpush1.msra.mxu0 0.0
        %277 = vmatprep.subr.mxu0 0.0
        %278 = vmatpush1.msra.mxu0 0.0
        %279 = vmatprep.subr.mxu0 0.0
        %280 = vmatpush1.msra.mxu0 0.0
        %281 = vmatprep.mubr.f32.mxu0 0.0
        %282 = vmatmul.mubr.f32.gmra.mrb[0].mxu0 %v215
        %v283 = vpop.f32.mrb[0].mxu0
        %v284 = vadd.f32 %v211, %v283
        %v285 = vpop.f32.mrb[0].mxu0
        %286 = vdwg.mxu0
        %v287 = vand.u32 2147483647, %v284
        %vm288 = vcmp.le.f32.partialorder %v287, 0.7853982
        %vm289 = vcmp.lt.s32.totalorder %v284, 0
        %v290 = vand.u32 %v284, 2139095040
        %v291 = vshrl.u32 %v290, 23
        %v292 = vsub.s32 %v291, 127
        %v293 = vand.u32 2147483647, %v284
        %v294 = vand.u32 %v293, 8388607
        %v295 = vor.u32 %v294, 8388608
        %v296 = vsub.s32 0, %v295
        %v297 = vadd.s32 %v292, 1
        %vm298 = vcmp.gt.s32.totalorder %v297, 0
        %v299 = vsel %vm298, %v297, 0
        %v300 = vshrl.u32 %v299, 5
        %v301 = vand.u32 %v299, 31
        %v302 = vsub.s32 32, %v301
        %v303 = vshrl.u32 683565275, %v302
        %v304 = vshll.u32 683565275, %v301
        %v305 = vshrl.u32 2475754826, %v302
        %v306 = vor.u32 %v304, %v305
        %v307 = vshll.u32 2475754826, %v301
        %v308 = vshrl.u32 2131351028, %v302
        %v309 = vor.u32 %v307, %v308
        %v310 = vshll.u32 2131351028, %v301
        %v311 = vshrl.u32 2102212464, %v302
        %v312 = vor.u32 %v310, %v311
        %v313 = vshll.u32 2102212464, %v301
        %v314 = vshrl.u32 920167782, %v302
        %v315 = vor.u32 %v313, %v314
        %v316 = vshll.u32 920167782, %v301
        %v317 = vshrl.u32 1326507024, %v302
        %v318 = vor.u32 %v316, %v317
        %vm319 = vcmp.lt.s32.totalorder %v300, 1
        %vm320 = vcmp.lt.s32.totalorder %v300, 2
        %vm321 = vcmp.lt.s32.totalorder %v300, 3
        %vm322 = vcmp.lt.s32.totalorder %v300, 4
        %v323 = vsel %vm319, %v303, %v306
        %v324 = vsel %vm322, %v312, 2102212464
        %v325 = vsel %vm321, %v309, %v324
        %v326 = vsel %vm320, %v323, %v325
        %v327 = vsel %vm319, %v306, %v309
        %v328 = vsel %vm322, %v315, 920167782
        %v329 = vsel %vm321, %v312, %v328
        %v330 = vsel %vm320, %v327, %v329
        %v331 = vsel %vm319, %v309, %v312
        %v332 = vsel %vm322, %v318, 1326507024
        %v333 = vsel %vm321, %v315, %v332
        %v334 = vsel %vm320, %v331, %v333
        %v335 = vshll.u32 %v295, 8
        %v336 = vmul.u32.u64.compose %v335, %v334
        %v337 = vextract.low.u32 %v336
        %v338 = vextract.high.u32 %v336
        %v339 = vmul.u32.u64.compose %v335, %v330
        %v340 = vextract.low.u32 %v339
        %v341 = vextract.high.u32 %v339
        %v342 = vmul.u32 %v335, %v326
        %v343 = vadd.s32 %v338, %v340
        %vm344 = vc.u32 %v338, %v340
        %v345 = vadd.s32 %v341, 1
        %v346 = vsel %vm344, %v345, %v341
        %v347 = vadd.s32 %v342, %v346
        %v348 = vadd.s32 %v347, 536870912
        %v349 = vshrl.u32 %v348, 30
        %v350 = vshll.u32 %v349, 30
        %v351 = vsub.s32 %v347, %v350
        %vm352 = vcmp.lt.s32.totalorder %v351, 0
        %v353 = vsub.s32 0, %v351
        %v354 = vsel %vm352, %v353, %v351
        %v355 = vclz %v354
        %v356 = vsub.s32 %v355, 2
        %vm357 = vcmp.gt.s32.totalorder 0, %v356
        %v358 = vsel %vm357, 0, %v356
        %v359 = vsub.s32 32, %v358
        %v360 = vshll.u32 %v351, %v358
        %v361 = vshrl.u32 %v343, %v359
        %v362 = vor.u32 %v360, %v361
        %v363 = vsub.s32 4294967266, %v358
        %v364 = vadd.s32 %v363, 127
        %v365 = vshll.u32 %v364, 23
        %v366 = vor.u32 4788187, %v365
        %v367 = vand.u32 2147483647, %v366
        %v369 = vcvt.s32.f32 %v362
        %v370 = vmul.f32 %v369, %v367
        %v371 = vxor.u32 %v370, 2147483648
        %v372 = vsel %vm289, %v371, %v370
        %v373 = vsub.s32 4, %v349
        %v374 = vsel %vm289, %v373, %v349
        %v375 = vsel %vm288, %v284, %v372
        %v376 = vsel %vm288, 0, %v374
        %v377 = vcosq.f32.pop %v375
        %v378 = vsinq.f32.pop %v375
        %vm379 = vweird.f32 %v284
        %v380 = vadd.s32 %v376, 3
        %v381 = vand.u32 %v380, 3
        %vm382 = vcmp.lt.s32.totalorder %v381, 2
        %vm383 = vcmp.eq.s32.totalorder %v381, 0
        %v384 = vxor.u32 %v378, 2147483648
        %v385 = vsel %vm383, %v377, %v384
        %vm386 = vcmp.eq.s32.totalorder %v381, 2
        %v387 = vxor.u32 %v377, 2147483648
        %v388 = vsel %vm386, %v387, %v378
        %v389 = vsel %vm382, %v385, %v388
        %v390 = vsel %vm379, nan, %v389
        %391 = vst [vmem:[%s200] sm:$0xff] %v390
        %s392 = sand.u32 %s97, 1
        %s393 = scalar_lea.sflag [#allocation4], %s392
        %s394 = sand.u32 %s97, 1
        %s395 = smul.addr %s394, 8
        %s396 = scalar_lea.vmem [#allocation7], %s395
        // Predicated region
        $region41: #{tpu_custom_call.1} parent=31 // pred_check
          %p397 = pneg %p107
        $region42: #{tpu_custom_call.1} parent=31 // pred_check_branch
          %399 = sbr.rel (%p397) target = $region44
        $region43: #{tpu_custom_call.1} parent=31 // pred_region
          %s401 = ssub.s32 128, 128
          %402 = vsyncadd %s393, %s401
          %s403 = smul.addr %s21, 128
          %s404 = scalar_lea.hbm %s3, %s403
          %s406 = sshll.u32 %s396, 4
          %s407 = int_to_ptr.vmem [resolvable:$true] %s406
          %409 = dma.vmem_to_hbm [thread:$0]  %s407, 128, %s404, %s393
        $region44: #{tpu_custom_call.1} parent=31 // pred_fallthru
          _
      $region32: #{tpu_custom_call.1} parent=5 // pred_fallthru
        _
      %p410 = scmp.le.s32.totalorder 2, %s16
      // Predicated region
      $region45: #{tpu_custom_call.1} parent=5 // pred_check
        %p411 = pneg %p410
      $region46: #{tpu_custom_call.1} parent=5 // pred_check_branch
        %413 = sbr.rel (%p411) target = $region48
      $region47: #{tpu_custom_call.1} parent=5 // pred_region
        %s414 = ssub.s32 %s16, 2
        // Predicated region
        $region49: #{tpu_custom_call.1} parent=47 // pred_check
          %p415 = pneg %p113
        $region50: #{tpu_custom_call.1} parent=47 // pred_check_branch
          %417 = sbr.rel (%p415) target = $region52
        $region51: #{tpu_custom_call.1} parent=47 // pred_region
          %s418 = sand.u32 %s98, 1
          %s419 = scalar_lea.sflag [#allocation4], %s418
          %s420 = sand.u32 %s98, 1
          %s421 = smul.addr %s420, 8
          %s422 = scalar_lea.vmem [#allocation7], %s421
          %423 = dma.done %s419, 128
        $region52: #{tpu_custom_call.1} parent=47 // pred_fallthru
          _
      $region48: #{tpu_custom_call.1} parent=5 // pred_fallthru
        _
    $region6: #{tpu_custom_call.1} parent=1 // loop_footer
      %s20 = sadd.s32 1, %s16
    $region7: #{tpu_custom_call.1} parent=1 // loop_footer_branch
      %15 = sbr.rel target = $region3
    $region8: #{tpu_custom_call.1} parent=1 // loop_exit
      _
    %424 = vsyncpa [#allocation3], 1
    %s425 = scalar_lea.sflag [#allocation3], 1
    %426 = vsyncpa %s425, 1
    %427 = vsyncpa [#allocation6], 1
    %428 = vsyncpa [#allocation4], 1
    %s429 = scalar_lea.sflag [#allocation4], 1
    %430 = vsyncpa %s429, 1

</llo_original>
